<compile_context>
chip_gen: v5e
topology: v5e:2x2
jax: 0.10.0
libtpu: 0.0.40
codegen_flags: <defaults>
</compile_context>

<pallas_src>
import functools

import jax
import jax.numpy as jnp
from jax import lax
from jax.experimental import pallas as pl
from jax.experimental.pallas import tpu as pltpu


def _round_up(a, m):
    return (a + m - 1) // m * m


def _temporal_cnn_kernel(w_ref, xc_ref, xn_ref, o_ref, rhs_ref, *,
                         kernel_size, dilation, negative_slope):
    # w_ref:   (C_out, K*C_in_p)   packed weight-normed filter
    # xc_ref:  (1, C_in_p, TL)     current length tile
    # xn_ref:  (1, C_in_p, TL)     next length tile (halo source)
    # o_ref:   (1, C_out, TL)
    # rhs_ref: (K*C_in_p, TL)      VMEM scratch holding the im2col stack
    c_in_p = xc_ref.shape[1]
    l_tile = o_ref.shape[2]

    if kernel_size > 1:
        halo = dilation * (kernel_size - 1)
        halo_cols = min(l_tile, _round_up(halo, 128))
        x_win = jnp.concatenate(
            [xc_ref[0], xn_ref[0, :, :halo_cols]], axis=1)   # (C_in_p, TL + halo_cols)
    else:
        x_win = xc_ref[0]

    # im2col: stack the K dilated slices along the contraction (sublane) dim. All offsets
    # are static; slab stores are sublane-tile aligned because C_in_p % 8 == 0.
    for k in range(kernel_size):
        off = k * dilation
        rhs_ref[pl.ds(k * c_in_p, c_in_p), :] = x_win[:, off:off + l_tile]

    # Single MXU matmul with contraction depth K*C_in_p; f32 accumulation.
    acc = jnp.dot(w_ref[...], rhs_ref[...], preferred_element_type=jnp.float32)

    if negative_slope != 1.0:  # nn.LeakyReLU(True) => slope 1.0 => identity, skipped.
        acc = jnp.where(acc >= 0, acc, negative_slope * acc)

    # TODO(synk): Dropout(0.2) implemented as eval-mode identity (no RNG masking).
    o_ref[0] = acc.astype(o_ref.dtype)


def temporal_cnn(x, weight_v, weight_g, *, kernel_size, stride, dilation, padding,
                 negative_slope=1.0):
    """x: (B, C_in, L) -> (B, C_out, L + padding - dilation*(K-1))."""
    assert stride == 1, "TemporalCnn (TCN block) is used with stride=1"
    B, c_in, L = x.shape
    c_out = weight_v.shape[0]
    itemsize = jnp.dtype(x.dtype).itemsize

    # weight_norm (glue): w = g * v / ||v||, norm over (in_channels, kernel) dims.
    v32 = weight_v.astype(jnp.float32)
    v_norm = jnp.sqrt(jnp.sum(v32 * v32, axis=(1, 2), keepdims=True))
    w = weight_g.astype(jnp.float32).reshape(c_out, 1, 1) * v32 / v_norm   # (C_out, C_in, K)

    # Pack weight as (C_out, K*C_in_p): k-major, channels zero-padded to a multiple of 8.
    c_in_p = _round_up(c_in, 8)
    w = jnp.transpose(w, (0, 2, 1))                                        # (C_out, K, C_in)
    w = jnp.pad(w, ((0, 0), (0, 0), (0, c_in_p - c_in)))                   # (C_out, K, C_in_p)
    w_packed = w.reshape(c_out, kernel_size * c_in_p).astype(x.dtype)

    # Geometry: causal conv + chomp => left padding only; tile l_out lane-densely.
    halo = dilation * (kernel_size - 1)
    l_out = L + padding - halo                    # length after Chomp1d
    assert l_out > 0
    l_tile = min(512, _round_up(l_out, 128))
    if halo > l_tile:                             # halo must fit inside one extra tile
        l_tile = _round_up(halo, 128)
    padded_l_out = _round_up(l_out, l_tile)
    nt = padded_l_out // l_tile
    lp_pad = (nt + 1) * l_tile                    # +1 tile so the "next" block always exists
    x_pad = jnp.pad(
        x, ((0, 0), (0, c_in_p - c_in), (padding, lp_pad - padding - L)))

    # VMEM budget (double-buffered blocks + scratch). Explicit limit keeps v7x
    # (64 MiB physical / 32 MiB scoped default) safe and raises v5e's 16 MiB default.
    w_bytes = c_out * kernel_size * c_in_p * itemsize
    xblk_bytes = c_in_p * l_tile * itemsize
    oblk_bytes = c_out * l_tile * itemsize
    rhs_bytes = kernel_size * c_in_p * l_tile * itemsize
    needed = 2 * (w_bytes + 2 * xblk_bytes + oblk_bytes) + rhs_bytes
    vmem_limit = int(min(max(needed + (8 << 20), 32 << 20), 48 << 20))

    cost = pl.CostEstimate(
        flops=2 * B * nt * c_out * kernel_size * c_in_p * l_tile,
        transcendentals=0,
        bytes_accessed=B * nt * (2 * xblk_bytes + oblk_bytes) + w_bytes)

    kernel = functools.partial(
        _temporal_cnn_kernel,
        kernel_size=kernel_size, dilation=dilation, negative_slope=negative_slope)

    out = pl.pallas_call(
        kernel,
        out_shape=jax.ShapeDtypeStruct((B, c_out, padded_l_out), x.dtype),
        grid_spec=pltpu.PrefetchScalarGridSpec(
            num_scalar_prefetch=0,
            grid=(B, nt),
            in_specs=[
                pl.BlockSpec((c_out, kernel_size * c_in_p), lambda b, j: (0, 0)),
                pl.BlockSpec((1, c_in_p, l_tile), lambda b, j: (b, 0, j)),
                pl.BlockSpec((1, c_in_p, l_tile), lambda b, j: (b, 0, j + 1)),
            ],
            out_specs=pl.BlockSpec((1, c_out, l_tile), lambda b, j: (b, 0, j)),
            scratch_shapes=[pltpu.VMEM((kernel_size * c_in_p, l_tile), x.dtype)],
        ),
        compiler_params=pltpu.CompilerParams(
            dimension_semantics=("parallel", "parallel"),
            vmem_limit_bytes=vmem_limit),
        cost_estimate=cost,
    )(w_packed, x_pad, x_pad)
    return out[:, :, :l_out]


def temporal_cnn_ref(x, weight_v, weight_g, *, kernel_size, stride, dilation, padding,
                     negative_slope=1.0):
    """Pure-JAX reference mirroring the PyTorch forward (eval-mode dropout)."""
    c_out = weight_v.shape[0]
    v32 = weight_v.astype(jnp.float32)
    v_norm = jnp.sqrt(jnp.sum(v32 * v32, axis=(1, 2), keepdims=True))
    w = (weight_g.astype(jnp.float32).reshape(c_out, 1, 1) * v32 / v_norm).astype(x.dtype)
    y = lax.conv_general_dilated(
        x, w, window_strides=(stride,), padding=[(padding, padding)],
        rhs_dilation=(dilation,), dimension_numbers=("NCH", "OIH", "NCH"))
    y = y[:, :, :y.shape[2] - padding]                      # Chomp1d
    return jnp.where(y >= 0, y, negative_slope * y)         # LeakyReLU(slope=1.0)


if __name__ == "__main__":
    key = jax.random.PRNGKey(0)
    B, c_in, c_out, L = 2, 4, 8, 16
    kernel_size, stride, dilation = 3, 1, 1
    padding = (kernel_size - 1) * dilation                  # causal TCN padding

    kx, kv = jax.random.split(key)
    x = jax.random.normal(kx, (B, c_in, L), jnp.float32)
    # Deterministic parameter init (shapes from nn.Conv1d(c_in, c_out, K)):
    weight_v = 0.05 * jax.random.normal(kv, (c_out, c_in, kernel_size), jnp.float32)
    # PyTorch weight_norm initializes g = ||v|| per output channel.
    weight_g = jnp.sqrt(jnp.sum(weight_v * weight_v, axis=(1, 2)))

    out = temporal_cnn(x, weight_v, weight_g, kernel_size=kernel_size,
                       stride=stride, dilation=dilation, padding=padding)
    out = jax.block_until_ready(out)

    ref = temporal_cnn_ref(x, weight_v, weight_g, kernel_size=kernel_size,
                           stride=stride, dilation=dilation, padding=padding)

    assert out.shape == (B, c_out, L), out.shape
    assert jnp.allclose(out, ref, atol=1e-5, rtol=1e-5), float(jnp.max(jnp.abs(out - ref)))
    print("KERNEL_OK")
</pallas_src>

<mosaic_0001>
module attributes {stable_mosaic.version = 11 : i64} {
  func.func @_temporal_cnn_kernel(%arg0: i32, %arg1: i32, %arg2: memref<8x24xf32, #tpu.memory_space<vmem>>, %arg3: memref<1x8x128xf32, #tpu.memory_space<vmem>>, %arg4: memref<1x8x128xf32, #tpu.memory_space<vmem>>, %arg5: memref<1x8x128xf32, #tpu.memory_space<vmem>>, %arg6: memref<24x128xf32, #tpu.memory_space<vmem>>) attributes {dimension_semantics = [#tpu.dimension_semantics<parallel>, #tpu.dimension_semantics<parallel>], iteration_bounds = array<i64: 2, 1>, scalar_prefetch = 0 : i64, scratch_operands = 1 : i64, tpu.core_type = #tpu.core_type<tc>, window_params = [{pipeline_mode = #tpu.pipeline_mode<synchronous>, transform_indices = @transform_0, window_bounds = array<i64: 8, 24>}, {transform_indices = @transform_1, window_bounds = array<i64: 1, 8, 128>}, {transform_indices = @transform_2, window_bounds = array<i64: 1, 8, 128>}, {transform_indices = @transform_3, window_bounds = array<i64: 1, 8, 128>}]} {
    %c0 = arith.constant 0 : index
    %c0_0 = arith.constant 0 : index
    %c0_1 = arith.constant 0 : index
    %0 = vector.load %arg3[%c0, %c0_0, %c0_1] : memref<1x8x128xf32, #tpu.memory_space<vmem>>, vector<1x8x128xf32>
    %1 = vector.shape_cast %0 : vector<1x8x128xf32> to vector<8x128xf32>
    %c0_2 = arith.constant 0 : index
    %c0_3 = arith.constant 0 : index
    %c0_4 = arith.constant 0 : index
    %2 = vector.load %arg4[%c0_2, %c0_3, %c0_4] : memref<1x8x128xf32, #tpu.memory_space<vmem>>, vector<1x8x128xf32>
    %3 = vector.shape_cast %2 : vector<1x8x128xf32> to vector<8x128xf32>
    %4 = tpu.concatenate %1, %3 in 1 : vector<8x128xf32>, vector<8x128xf32> -> vector<8x256xf32>
    %5 = vector.extract_strided_slice %4 {offsets = [0, 0], sizes = [8, 128], strides = [1, 1]} : vector<8x256xf32> to vector<8x128xf32>
    %c0_5 = arith.constant 0 : index
    %c0_6 = arith.constant 0 : index
    %6 = vector.load %arg6[%c0_5, %c0_6] : memref<24x128xf32, #tpu.memory_space<vmem>>, vector<8x128xf32>
    tpu.vector_store %arg6[%c0_5, %c0_6], %5 {strides = array<i32>} : memref<24x128xf32, #tpu.memory_space<vmem>>, vector<8x128xf32>,
    %7 = vector.extract_strided_slice %4 {offsets = [0, 1], sizes = [8, 128], strides = [1, 1]} : vector<8x256xf32> to vector<8x128xf32>
    %c8 = arith.constant 8 : index
    %c0_7 = arith.constant 0 : index
    %8 = vector.load %arg6[%c8, %c0_7] : memref<24x128xf32, #tpu.memory_space<vmem>>, vector<8x128xf32>
    tpu.vector_store %arg6[%c8, %c0_7], %7 {strides = array<i32>} : memref<24x128xf32, #tpu.memory_space<vmem>>, vector<8x128xf32>,
    %9 = vector.extract_strided_slice %4 {offsets = [0, 2], sizes = [8, 128], strides = [1, 1]} : vector<8x256xf32> to vector<8x128xf32>
    %c16 = arith.constant 16 : index
    %c0_8 = arith.constant 0 : index
    %10 = vector.load %arg6[%c16, %c0_8] : memref<24x128xf32, #tpu.memory_space<vmem>>, vector<8x128xf32>
    tpu.vector_store %arg6[%c16, %c0_8], %9 {strides = array<i32>} : memref<24x128xf32, #tpu.memory_space<vmem>>, vector<8x128xf32>,
    %c0_9 = arith.constant 0 : index
    %c0_10 = arith.constant 0 : index
    %11 = vector.load %arg2[%c0_9, %c0_10] : memref<8x24xf32, #tpu.memory_space<vmem>>, vector<8x24xf32>
    %c0_11 = arith.constant 0 : index
    %c0_12 = arith.constant 0 : index
    %12 = vector.load %arg6[%c0_11, %c0_12] : memref<24x128xf32, #tpu.memory_space<vmem>>, vector<24x128xf32>
    %cst = arith.constant dense<0.000000e+00> : vector<8x128xf32>
    %13 = tpu.matmul %11, %12, %cst {dimension_numbers = #tpu.dot_dimension_numbers<[1], [0], [0], [1], [0, 0, 1, 1], [], []>} : vector<8x24xf32>, vector<24x128xf32>, vector<8x128xf32> -> vector<8x128xf32>
    %c0_13 = arith.constant 0 : index
    %c0_14 = arith.constant 0 : index
    %c0_15 = arith.constant 0 : index
    %14 = vector.load %arg5[%c0_13, %c0_14, %c0_15] : memref<1x8x128xf32, #tpu.memory_space<vmem>>, vector<1x8x128xf32>
    %15 = vector.shape_cast %14 : vector<1x8x128xf32> to vector<8x128xf32>
    %16 = vector.shape_cast %13 : vector<8x128xf32> to vector<1x8x128xf32>
    tpu.vector_store %arg5[%c0_13, %c0_14, %c0_15], %16 {strides = array<i32>} : memref<1x8x128xf32, #tpu.memory_space<vmem>>, vector<1x8x128xf32>,
    return
  }
  func.func @transform_0(%arg0: i32, %arg1: i32) -> (i32, i32) {
    %c0_i32 = arith.constant 0 : i32
    %c0_i32_0 = arith.constant 0 : i32
    %c0_i32_1 = arith.constant 0 : i32
    return %c0_i32, %c0_i32_0 : i32, i32
  }
  func.func @transform_1(%arg0: i32, %arg1: i32) -> (i32, i32, i32) {
    %c0_i32 = arith.constant 0 : i32
    %c0_i32_0 = arith.constant 0 : i32
    return %arg0, %c0_i32, %arg1 : i32, i32, i32
  }
  func.func @transform_2(%arg0: i32, %arg1: i32) -> (i32, i32, i32) {
    %c1_i32 = arith.constant 1 : i32
    %0 = arith.addi %arg1, %c1_i32 : i32
    %c0_i32 = arith.constant 0 : i32
    %c0_i32_0 = arith.constant 0 : i32
    return %arg0, %c0_i32, %0 : i32, i32, i32
  }
  func.func @transform_3(%arg0: i32, %arg1: i32) -> (i32, i32, i32) {
    %c0_i32 = arith.constant 0 : i32
    %c0_i32_0 = arith.constant 0 : i32
    return %arg0, %c0_i32, %arg1 : i32, i32, i32
  }
}

</mosaic_0001>

<llo_original>
// kernel: tpu_custom_call.1
$region0: #{tpu_custom_call.1}
  #allocation0 [shape = 'u32[]', space=smem, size = 0x4, offset = 0x4, fixed_abs, tag = 'smem constant byte address 0x4 - core index']
  #allocation1 [shape = 'u32[72,128]{1,0:T(1,128)}', space=vmem, size = 0x9000, scoped, tag = 'internal scratch']
  #allocation2 [shape = 'f32[24,128]{1,0:T(8,128)}', space=vmem, size = 0x3000, scoped, tag = 'scratch operand']
  %s0 = inlined_call_operand.hbm [shape: f32[8,24], index: 0, kind: input, shape index: {}]
  %s1 = inlined_call_operand.hbm [shape: f32[2,8,256], index: 1, kind: input, shape index: {}]
  %s2 = inlined_call_operand.hbm [shape: f32[2,8,256], index: 2, kind: input, shape index: {}]
  %s3 = inlined_call_operand.hbm [shape: f32[2,8,128], index: 3, kind: output, shape index: {}]
  %s4 = sld [smem:[#allocation0]]
  $region57: #{tpu_custom_call.1} parent=0
    _
  %s6 = ssub.s32 1, %s4
  %s7 = scalar_select 0, %s6, %s4
  $region1: #{tpu_custom_call.1} parent=0
    #allocation3 [shape = 'u8[4096]{0}', space=vmem, size = 0x1000, scoped, tag = 'input window, operand 0, single buffered']
    #allocation4 [shape = 's32[2]{0}', space=sflag, size = 0x8, scoped, tag = 'scoped memory for tpu_custom_call.1']
    #allocation5 [shape = 's32[2]{0}', space=sflag, size = 0x8, scoped, tag = 'scoped memory for tpu_custom_call.1']
    #allocation6 [shape = 'u8[8192]{0}', space=vmem, size = 0x2000, scoped, tag = 'input window, operand 1']
    #allocation7 [shape = 's32[2]{0}', space=sflag, size = 0x8, scoped, tag = 'scoped memory for tpu_custom_call.1']
    #allocation8 [shape = 'u8[8192]{0}', space=vmem, size = 0x2000, scoped, tag = 'input window, operand 2']
    #allocation9 [shape = 'u8[8192]{0}', space=vmem, size = 0x2000, scoped, tag = 'output window, operand 0']
    %8 = vsyncpa [#allocation4], 0
    %9 = vsyncpa [#allocation7], 0
    %s10 = scalar_lea.sflag [#allocation7], 1
    %11 = vsyncpa %s10, 0
    %12 = vsyncpa [#allocation5], 0
    %s13 = scalar_lea.sflag [#allocation5], 1
    %14 = vsyncpa %s13, 0
    loop: start=0, step=1, limit=4
    $region2: #{tpu_custom_call.1} parent=1 // loop_pre_header
      _
    $region3: #{tpu_custom_call.1} parent=1 // loop_header
      %s16 = sphi 0, %s20
      %p17 = scmp.ge.s32.totalorder %s16, 4
      %s23 = sphi 0, %s35
      %s24 = sphi 0, %s31
      %s25 = sphi 0, %s23
      %s26 = sphi 0, %s24
      %s27 = sphi 0, %s25
      %s28 = sphi 0, %s26
      %s36 = sphi 0, %s36
      %s38 = sphi 0, %s36
      %s39 = sphi 0, %s38
      %s53 = sphi 0, %s39
      %s61 = sphi 0, %s63
      %s64 = sphi 0, %s61
      %s65 = sphi 0, %s64
      %s81 = sphi 0, %s65
      %s91 = sphi 0, %s93
      %s94 = sphi 0, %s91
      %s95 = sphi 0, %s94
      %s111 = sphi 0, %s95
      %s119 = sphi 0, %s121
      %s122 = sphi 0, %s119
      %s123 = sphi 0, %s122
      %s139 = sphi 0, %s123
    $region4: #{tpu_custom_call.1} parent=1 // loop_header_branch
      %19 = sbr.rel (%p17) target = $region8
    $region5: #{tpu_custom_call.1} parent=1 // loop_body
      %s21 = ssub.s32 %s16, 1
      %s22 = ssub.s32 %s16, 2
      %s29 = sadd.s32 1, %s24
      %p30 = scmp.ge.s32.totalorder %s29, 1
      %s31 = scalar_select %p30, 0, %s29
      %s32 = sadd.s32 1, %s23
      %s33 = scalar_select %p30, %s32, %s23
      %p34 = scmp.ge.s32.totalorder %s33, 2
      %s35 = scalar_select %p34, 0, %s33
      %s37 = sadd.s32 %s36, 1
      %p40 = scmp.eq.s32.totalorder %s16, 1
      %p41 = scmp.ne.s32.totalorder %s36, %s38
      %p42 = scmp.eq.s32.totalorder %s16, 0
      %p43 = por %p41, %p42
      %p44 = scmp.ne.s32.totalorder %s36, %s38
      %p45 = scmp.eq.s32.totalorder %s21, 1
      %p46 = por %p44, %p45
      %p47 = scmp.ne.s32.totalorder %s38, %s39
      %p48 = scmp.eq.s32.totalorder %s21, 0
      %p49 = por %p47, %p48
      %p50 = scmp.ne.s32.totalorder %s38, %s39
      %p51 = scmp.eq.s32.totalorder %s22, 1
      %p52 = por %p50, %p51
      %p54 = scmp.ne.s32.totalorder %s39, %s53
      %p55 = scmp.eq.s32.totalorder %s22, 0
      %p56 = por %p54, %p55
      %s57 = ssub.s32 %s23, %s35
      %s58 = ssub.s32 %s24, %s31
      %s59 = sor.u32 %s57, %s58
      %p60 = scmp.eq.s32.totalorder %s59, 0
      %s62 = sadd.s32 %s61, 1
      %s63 = scalar_select %p60, %s61, %s62
      %p66 = pneg %p60
      %p67 = scmp.eq.s32.totalorder %s16, 1
      %p68 = por %p66, %p67
      %p69 = scmp.ne.s32.totalorder %s61, %s64
      %p70 = scmp.eq.s32.totalorder %s16, 0
      %p71 = por %p69, %p70
      %p72 = scmp.ne.s32.totalorder %s61, %s64
      %p73 = scmp.eq.s32.totalorder %s21, 1
      %p74 = por %p72, %p73
      %p75 = scmp.ne.s32.totalorder %s64, %s65
      %p76 = scmp.eq.s32.totalorder %s21, 0
      %p77 = por %p75, %p76
      %p78 = scmp.ne.s32.totalorder %s64, %s65
      %p79 = scmp.eq.s32.totalorder %s22, 1
      %p80 = por %p78, %p79
      %p82 = scmp.ne.s32.totalorder %s65, %s81
      %p83 = scmp.eq.s32.totalorder %s22, 0
      %p84 = por %p82, %p83
      %s85 = sadd.s32 %s24, 1
      %s86 = sadd.s32 %s31, 1
      %s87 = ssub.s32 %s23, %s35
      %s88 = ssub.s32 %s85, %s86
      %s89 = sor.u32 %s87, %s88
      %p90 = scmp.eq.s32.totalorder %s89, 0
      %s92 = sadd.s32 %s91, 1
      %s93 = scalar_select %p90, %s91, %s92
      %p96 = pneg %p90
      %p97 = scmp.eq.s32.totalorder %s16, 1
      %p98 = por %p96, %p97
      %p99 = scmp.ne.s32.totalorder %s91, %s94
      %p100 = scmp.eq.s32.totalorder %s16, 0
      %p101 = por %p99, %p100
      %p102 = scmp.ne.s32.totalorder %s91, %s94
      %p103 = scmp.eq.s32.totalorder %s21, 1
      %p104 = por %p102, %p103
      %p105 = scmp.ne.s32.totalorder %s94, %s95
      %p106 = scmp.eq.s32.totalorder %s21, 0
      %p107 = por %p105, %p106
      %p108 = scmp.ne.s32.totalorder %s94, %s95
      %p109 = scmp.eq.s32.totalorder %s22, 1
      %p110 = por %p108, %p109
      %p112 = scmp.ne.s32.totalorder %s95, %s111
      %p113 = scmp.eq.s32.totalorder %s22, 0
      %p114 = por %p112, %p113
      %s115 = ssub.s32 %s23, %s35
      %s116 = ssub.s32 %s24, %s31
      %s117 = sor.u32 %s115, %s116
      %p118 = scmp.eq.s32.totalorder %s117, 0
      %s120 = sadd.s32 %s119, 1
      %s121 = scalar_select %p118, %s119, %s120
      %p124 = pneg %p118
      %p125 = scmp.eq.s32.totalorder %s16, 1
      %p126 = por %p124, %p125
      %p127 = scmp.ne.s32.totalorder %s119, %s122
      %p128 = scmp.eq.s32.totalorder %s16, 0
      %p129 = por %p127, %p128
      %p130 = scmp.ne.s32.totalorder %s119, %s122
      %p131 = scmp.eq.s32.totalorder %s21, 1
      %p132 = por %p130, %p131
      %p133 = scmp.ne.s32.totalorder %s122, %s123
      %p134 = scmp.eq.s32.totalorder %s21, 0
      %p135 = por %p133, %p134
      %p136 = scmp.ne.s32.totalorder %s122, %s123
      %p137 = scmp.eq.s32.totalorder %s22, 1
      %p138 = por %p136, %p137
      %p140 = scmp.ne.s32.totalorder %s123, %s139
      %p141 = scmp.eq.s32.totalorder %s22, 0
      %p142 = por %p140, %p141
      %p143 = scmp.le.s32.totalorder 1, %s16
      %p144 = scmp.lt.s32.totalorder %s16, 3
      %p145 = pnand %p143, %p144
      %p146 = pneg %p145
      // Predicated region
      $region9: #{tpu_custom_call.1} parent=5 // pred_check
        _
      $region10: #{tpu_custom_call.1} parent=5 // pred_check_branch
        %148 = sbr.rel (%p145) target = $region12
      $region11: #{tpu_custom_call.1} parent=5 // pred_region
        %s149 = ssub.s32 %s16, 1
        // Predicated region
        $region13: #{tpu_custom_call.1} parent=11 // pred_check
          %p150 = pneg %p49
        $region14: #{tpu_custom_call.1} parent=11 // pred_check_branch
          %152 = sbr.rel (%p150) target = $region16
        $region15: #{tpu_custom_call.1} parent=11 // pred_region
          %154 = vsyncadd [#allocation4], 0
          %s156 = sshll.u32 %s0, 4
          %s157 = int_to_ptr.hbm [resolvable:$true] %s156
          %s158 = sshll.u32 [#allocation3], 4
          %s159 = int_to_ptr.vmem [resolvable:$true] %s158
          %161 = dma.hbm_to_vmem [thread:$0]  %s157, 128, %s159, [#allocation4]
        $region16: #{tpu_custom_call.1} parent=11 // pred_fallthru
          _
      $region12: #{tpu_custom_call.1} parent=5 // pred_fallthru
        _
      %p162 = scmp.lt.s32.totalorder %s16, 2
      // Predicated region
      $region17: #{tpu_custom_call.1} parent=5 // pred_check
        %p163 = pneg %p162
      $region18: #{tpu_custom_call.1} parent=5 // pred_check_branch
        %165 = sbr.rel (%p163) target = $region20
      $region19: #{tpu_custom_call.1} parent=5 // pred_region
        // Predicated region
        $region21: #{tpu_custom_call.1} parent=19 // pred_check
          %p166 = pneg %p71
        $region22: #{tpu_custom_call.1} parent=19 // pred_check_branch
          %168 = sbr.rel (%p166) target = $region24
        $region23: #{tpu_custom_call.1} parent=19 // pred_region
          %s169 = sand.u32 %s16, 1
          %s170 = scalar_lea.sflag [#allocation7], %s169
          %s171 = sand.u32 %s61, 1
          %s172 = smul.addr %s171, 8
          %s173 = scalar_lea.vmem [#allocation6], %s172
          %175 = vsyncadd %s170, 0
          %s176 = smul.addr %s23, 2
          %s177 = sadd.s32 %s24, %s176
          %s178 = smul.addr %s177, 8
          %s179 = scalar_lea.hbm %s1, %s178
          %s181 = sshll.u32 %s179, 4
          %s182 = int_to_ptr.hbm [resolvable:$true] %s181
          %s183 = sshll.u32 %s173, 4
          %s184 = int_to_ptr.vmem [resolvable:$true] %s183
          %186 = dma.hbm_to_vmem [thread:$0]  %s182, 128, %s184, %s170
        $region24: #{tpu_custom_call.1} parent=19 // pred_fallthru
          _
        // Predicated region
        $region25: #{tpu_custom_call.1} parent=19 // pred_check
          %p187 = pneg %p101
        $region26: #{tpu_custom_call.1} parent=19 // pred_check_branch
          %189 = sbr.rel (%p187) target = $region28
        $region27: #{tpu_custom_call.1} parent=19 // pred_region
          %s190 = sand.u32 %s16, 1
          %s191 = scalar_lea.sflag [#allocation7], %s190
          %s192 = sand.u32 %s91, 1
          %s193 = smul.addr %s192, 8
          %s194 = scalar_lea.vmem [#allocation8], %s193
          %s195 = sadd.s32 %s24, 1
          %197 = vsyncadd %s191, 0
          %s198 = smul.addr %s23, 2
          %s199 = sadd.s32 %s195, %s198
          %s200 = smul.addr %s199, 8
          %s201 = scalar_lea.hbm %s2, %s200
          %s203 = sshll.u32 %s201, 4
          %s204 = int_to_ptr.hbm [resolvable:$true] %s203
          %s205 = sshll.u32 %s194, 4
          %s206 = int_to_ptr.vmem [resolvable:$true] %s205
          %208 = dma.hbm_to_vmem [thread:$0]  %s204, 128, %s206, %s191
        $region28: #{tpu_custom_call.1} parent=19 // pred_fallthru
          _
      $region20: #{tpu_custom_call.1} parent=5 // pred_fallthru
        _
      %p209 = scmp.le.s32.totalorder 1, %s16
      %p210 = scmp.lt.s32.totalorder %s16, 3
      %p211 = pnand %p209, %p210
      %p212 = pneg %p211
      // Predicated region
      $region29: #{tpu_custom_call.1} parent=5 // pred_check
        _
      $region30: #{tpu_custom_call.1} parent=5 // pred_check_branch
        %214 = sbr.rel (%p211) target = $region32
      $region31: #{tpu_custom_call.1} parent=5 // pred_region
        %s215 = ssub.s32 %s16, 1
        // Predicated region
        $region33: #{tpu_custom_call.1} parent=31 // pred_check
          %p216 = pneg %p49
        $region34: #{tpu_custom_call.1} parent=31 // pred_check_branch
          %218 = sbr.rel (%p216) target = $region36
        $region35: #{tpu_custom_call.1} parent=31 // pred_region
          %220 = dma.done [#allocation4], 128
        $region36: #{tpu_custom_call.1} parent=31 // pred_fallthru
          _
        %s221 = sand.u32 %s21, 1
        %s222 = scalar_lea.sflag [#allocation7], %s221
        %s223 = sand.u32 %s64, 1
        %s224 = smul.addr %s223, 8
        %s225 = scalar_lea.vmem [#allocation6], %s224
        // Predicated region
        $region37: #{tpu_custom_call.1} parent=31 // pred_check
          %p226 = pneg %p77
        $region38: #{tpu_custom_call.1} parent=31 // pred_check_branch
          %228 = sbr.rel (%p226) target = $region40
        $region39: #{tpu_custom_call.1} parent=31 // pred_region
          %230 = dma.done %s222, 128
        $region40: #{tpu_custom_call.1} parent=31 // pred_fallthru
          _
        %s231 = sand.u32 %s21, 1
        %s232 = scalar_lea.sflag [#allocation7], %s231
        %s233 = sand.u32 %s94, 1
        %s234 = smul.addr %s233, 8
        %s235 = scalar_lea.vmem [#allocation8], %s234
        // Predicated region
        $region41: #{tpu_custom_call.1} parent=31 // pred_check
          %p236 = pneg %p107
        $region42: #{tpu_custom_call.1} parent=31 // pred_check_branch
          %238 = sbr.rel (%p236) target = $region44
        $region43: #{tpu_custom_call.1} parent=31 // pred_region
          %240 = dma.done %s232, 128
        $region44: #{tpu_custom_call.1} parent=31 // pred_fallthru
          _
        %p241 = pneg %p49
        %p242 = pneg %p46
        %s243 = sand.u32 %s21, 1
        %s244 = scalar_lea.sflag [#allocation7], %s243
        %s245 = sand.u32 %s64, 1
        %s246 = smul.addr %s245, 8
        %s247 = scalar_lea.vmem [#allocation6], %s246
        %p248 = pneg %p77
        %p249 = pneg %p74
        %s250 = sand.u32 %s21, 1
        %s251 = scalar_lea.sflag [#allocation7], %s250
        %s252 = sand.u32 %s94, 1
        %s253 = smul.addr %s252, 8
        %s254 = scalar_lea.vmem [#allocation8], %s253
        %p255 = pneg %p107
        %p256 = pneg %p104
        %p257 = pneg %p135
        %p258 = pneg %p132
        %s259 = sand.u32 %s122, 1
        %s260 = scalar_lea.sflag [#allocation5], %s259
        %s261 = sand.u32 %s122, 1
        %s262 = smul.addr %s261, 8
        %s263 = scalar_lea.vmem [#allocation9], %s262
        %s264 = sadd.s32 %s26, 1
        %v265 = vld [vmem:[%s225] sm:$0xff]
        %v266 = vld [vmem:[%s235] sm:$0xff]
        %267 = vst [vmem:[#allocation2] sm:$0xff] %v265
        %270 = vrot.lane.b32.xlu0 %v265, 127
        %v271 = vpop.permute.xlu0 %270
        %272 = vrot.lane.b32.xlu0 %v266, 127
        %v273 = vpop.permute.xlu0 %272
        %vm274 = vcmask 1039360
        %v275 = vsel %vm274, %v271, %v273
        %277 = vst [vmem:[#allocation2 + $0x8] sm:$0xff] %v275
        %278 = vrot.lane.b32.xlu0 %v265, 126
        %v279 = vpop.permute.xlu0 %278
        %280 = vrot.lane.b32.xlu0 %v266, 126
        %v281 = vpop.permute.xlu0 %280
        %vm282 = vcmask 1031168
        %v283 = vsel %vm282, %v279, %v281
        %285 = vst [vmem:[#allocation2 + $0x10] sm:$0xff] %v283
        %v286 = vld [vmem:[#allocation3] sm:$0xff]
        %v287 = vld [vmem:[#allocation2] sm:$0xff]
        %v288 = vld [vmem:[#allocation2 + $0x8] sm:$0xff]
        %v289 = vld [vmem:[#allocation2 + $0x10] sm:$0xff]
        %vm290 = vcmask 195584
        %v292 = vsel %vm290, %v286, 0
        %294 = vmatpush.msra.mxu0 0.0
        %295 = vmatpush.msra.mxu0 0.0
        %296 = vmatpush.msra.mxu0 0.0
        %297 = vmatpush.msra.mxu0 0.0
        %298 = vmatpush.msra.mxu0 0.0
        %299 = vmatpush.msra.mxu0 0.0
        %300 = vmatpush.msra.mxu0 0.0
        %301 = vmatpush.msra.mxu0 0.0
        %302 = vmatpush.msra.mxu0 0.0
        %303 = vmatpush.msra.mxu0 0.0
        %304 = vmatpush.msra.mxu0 0.0
        %305 = vmatpush.msra.mxu0 0.0
        %306 = vmatpush.msra.mxu0 0.0
        %307 = vmatpush.msra.mxu0 %v289
        %308 = vmatpush.msra.mxu0 %v288
        %309 = vmatpush.msra.mxu0 %v287
        %310 = vmatmul.f32.gmra.mxu0 %v292
        %v311 = vpop.f32.mrf.mxu0
        %v312 = vadd.f32 0.0, %v311
        %313 = vdwg.mxu0
        %314 = vst [vmem:[%s263] sm:$0xff] %v312
        %s315 = sand.u32 %s122, 1
        %s316 = scalar_lea.sflag [#allocation5], %s315
        %s317 = sand.u32 %s122, 1
        %s318 = smul.addr %s317, 8
        %s319 = scalar_lea.vmem [#allocation9], %s318
        // Predicated region
        $region45: #{tpu_custom_call.1} parent=31 // pred_check
          %p320 = pneg %p132
        $region46: #{tpu_custom_call.1} parent=31 // pred_check_branch
          %322 = sbr.rel (%p320) target = $region48
        $region47: #{tpu_custom_call.1} parent=31 // pred_region
          %324 = vsyncadd %s316, 0
          %s325 = sadd.s32 %s26, %s25
          %s326 = smul.addr %s325, 8
          %s327 = scalar_lea.hbm %s3, %s326
          %s329 = sshll.u32 %s319, 4
          %s330 = int_to_ptr.vmem [resolvable:$true] %s329
          %s331 = sshll.u32 %s327, 4
          %s332 = int_to_ptr.hbm [resolvable:$true] %s331
          %334 = dma.vmem_to_hbm [thread:$0]  %s330, 128, %s332, %s316
        $region48: #{tpu_custom_call.1} parent=31 // pred_fallthru
          _
      $region32: #{tpu_custom_call.1} parent=5 // pred_fallthru
        _
      %p335 = scmp.le.s32.totalorder 2, %s16
      // Predicated region
      $region49: #{tpu_custom_call.1} parent=5 // pred_check
        %p336 = pneg %p335
      $region50: #{tpu_custom_call.1} parent=5 // pred_check_branch
        %338 = sbr.rel (%p336) target = $region52
      $region51: #{tpu_custom_call.1} parent=5 // pred_region
        %s339 = ssub.s32 %s16, 2
        // Predicated region
        $region53: #{tpu_custom_call.1} parent=51 // pred_check
          %p340 = pneg %p138
        $region54: #{tpu_custom_call.1} parent=51 // pred_check_branch
          %342 = sbr.rel (%p340) target = $region56
        $region55: #{tpu_custom_call.1} parent=51 // pred_region
          %s343 = sand.u32 %s123, 1
          %s344 = scalar_lea.sflag [#allocation5], %s343
          %s345 = sand.u32 %s123, 1
          %s346 = smul.addr %s345, 8
          %s347 = scalar_lea.vmem [#allocation9], %s346
          %349 = dma.done %s344, 128
        $region56: #{tpu_custom_call.1} parent=51 // pred_fallthru
          _
      $region52: #{tpu_custom_call.1} parent=5 // pred_fallthru
        _
    $region6: #{tpu_custom_call.1} parent=1 // loop_footer
      %s20 = sadd.s32 1, %s16
    $region7: #{tpu_custom_call.1} parent=1 // loop_footer_branch
      %15 = sbr.rel target = $region3
    $region8: #{tpu_custom_call.1} parent=1 // loop_exit
      _
    %350 = vsyncpa [#allocation4], 1
    %s351 = scalar_lea.sflag [#allocation4], 1
    %352 = vsyncpa %s351, 1
    %353 = vsyncpa [#allocation7], 1
    %s354 = scalar_lea.sflag [#allocation7], 1
    %355 = vsyncpa %s354, 1
    %356 = vsyncpa [#allocation5], 1
    %s357 = scalar_lea.sflag [#allocation5], 1
    %358 = vsyncpa %s357, 1

</llo_original>
